<compile_context>
chip_gen: v6e
topology: v6e:2x2x1
jax: 0.10.0
libtpu: 0.0.40
codegen_flags: <defaults>
</compile_context>

<pallas_src>
import math
import jax
import jax.numpy as jnp
from jax.experimental import pallas as pl
from jax.experimental.pallas import tpu as pltpu

B, L, C = 2, 16, 32          # batch, seq length, d_model
KPOOL, SPOOL, PPOOL = 3, 2, 1
L_OUT = (L + 2 * PPOOL - KPOOL) // SPOOL + 1   # = 8 for L=16
EPS = 1e-5


def conv_layer_kernel(x_ref, w_ref, p_ref, o_ref, y_ref):
    # x_ref: (B, L, C)      f32 input, channels last
    # w_ref: (3*C, C)       bf16; row block k holds conv_weight[co, ci, k] at row k*C+ci
    # p_ref: (3, C)         f32; rows = [conv_bias, bn_gamma, bn_beta]
    # o_ref: (B, L_OUT, C)  f32 output
    # y_ref: (B*L, C)       f32 VMEM scratch (post-ReLU activations for the pool)
    x = x_ref[...].astype(jnp.bfloat16)                              # cast in-kernel (VPU)

    # ---- circular taps: k=0 -> x[(l-1) mod L], k=1 -> x[l], k=2 -> x[(l+1) mod L] ----
    left = jnp.concatenate([x[:, L - 1:, :], x[:, :L - 1, :]], axis=1)
    right = jnp.concatenate([x[:, 1:, :], x[:, :1, :]], axis=1)
    xs_cat = jnp.concatenate([left, x, right], axis=-1)              # (B, L, 3C) bf16
    xs2 = xs_cat.reshape(B * L, 3 * C)                               # free: merges leading dims

    # ---- Conv1d as ONE MXU matmul: (B*L, 3C) x (3C, C), f32 accumulate ----
    acc = jnp.dot(xs2, w_ref[...], preferred_element_type=jnp.float32)

    p = p_ref[...]                                                   # (3, C) f32
    bias, gamma, beta = p[0:1, :], p[1:2, :], p[2:3, :]
    acc = acc + bias                                                 # conv bias (one vadd)

    # ---- BatchNorm1d training-mode (biased stats over the B*L rows), fused affine ----
    mean = jnp.mean(acc, axis=0, keepdims=True)
    var = jnp.mean((acc - mean) ** 2, axis=0, keepdims=True)
    scale = gamma * jax.lax.rsqrt(var + EPS)                         # (1, C), rsqrt -> EUP
    shift = beta - mean * scale                                      # (1, C)

    # ---- BN + ReLU, staged in VMEM scratch for the strided pooling reads ----
    y_ref[...] = jnp.maximum(acc * scale + shift, 0.0)

    # ---- MaxPool1d(k=3, s=2, p=1): out[l] = max(y[2l-1], y[2l], y[2l+1]) ----
    # The -inf pad at l=0 never wins because ReLU output >= 0, so the missing "left"
    # element is replaced by the center element (already in the window).
    # Row index in y_ref is b*L + i; L is even, so even/odd rows are global stride-2 rows.
    ctr = y_ref[pl.ds(0, B * L_OUT, stride=2), :].reshape(B, L_OUT, C)     # y[2l]
    rgt = y_ref[pl.ds(1, B * L_OUT, stride=2), :].reshape(B, L_OUT, C)     # y[2l+1]
    lft = jnp.concatenate([ctr[:, :1, :], rgt[:, :L_OUT - 1, :]], axis=1)  # y[2l-1]
    o_ref[...] = jnp.maximum(jnp.maximum(ctr, rgt), lft)             # single full-block store


def conv_layer_normal(x, conv_weight, conv_bias, bn_gamma, bn_beta):
    """x: (B, L, C) f32; conv_weight: (C, C, 3) [co, ci, k]; others: (C,)."""
    # weight -> (3C, C): row k*C+ci, col co == conv_weight[co, ci, k]; bf16 for the MXU.
    w_cat = jnp.transpose(conv_weight, (2, 1, 0)).reshape(3 * C, C).astype(jnp.bfloat16)
    params = jnp.stack([conv_bias, bn_gamma, bn_beta], axis=0).astype(jnp.float32)  # (3, C)

    # Whole working set is ~16 KiB -> no grid / no tiling; everything lives in VMEM.
    return pl.pallas_call(
        conv_layer_kernel,
        out_shape=jax.ShapeDtypeStruct((B, L_OUT, C), jnp.float32),
        in_specs=[pl.BlockSpec(memory_space=pltpu.MemorySpace.VMEM)] * 3,
        out_specs=pl.BlockSpec(memory_space=pltpu.MemorySpace.VMEM),
        scratch_shapes=[pltpu.VMEM((B * L, C), jnp.float32)],
    )(x, w_cat, params)


def reference(x, weight, bias, gamma, beta):
    """Pure-JAX (f32) re-implementation of the PyTorch forward (NCL internally)."""
    xp = jnp.transpose(x, (0, 2, 1))                                    # (B, C, L)
    xpad = jnp.concatenate([xp[:, :, -1:], xp, xp[:, :, :1]], axis=2)   # circular pad
    y = jnp.zeros((B, C, L), jnp.float32)
    for k in range(3):
        y = y + jnp.einsum('oi,bil->bol', weight[:, :, k], xpad[:, :, k:k + L])
    y = y + bias[None, :, None]
    mean = jnp.mean(y, axis=(0, 2), keepdims=True)
    var = jnp.mean((y - mean) ** 2, axis=(0, 2), keepdims=True)
    y = (y - mean) / jnp.sqrt(var + EPS) * gamma[None, :, None] + beta[None, :, None]
    y = jnp.maximum(y, 0.0)
    ypad = jnp.pad(y, ((0, 0), (0, 0), (1, 1)), constant_values=-jnp.inf)
    out = jnp.stack([jnp.max(ypad[:, :, 2 * l:2 * l + 3], axis=2)
                     for l in range(L_OUT)], axis=2)                     # (B, C, L_out)
    return jnp.transpose(out, (0, 2, 1))                                 # (B, L_out, C)


if __name__ == "__main__":
    key = jax.random.PRNGKey(0)
    kx, kw, kb = jax.random.split(key, 3)

    x = jax.random.normal(kx, (B, L, C), jnp.float32)

    # Deterministic parameter init (shapes match nn.Conv1d(C, C, 3) + BatchNorm1d(C)).
    bound = 1.0 / math.sqrt(C * 3)
    conv_weight = jax.random.uniform(kw, (C, C, 3), jnp.float32, -bound, bound)  # (co, ci, k)
    conv_bias = jax.random.uniform(kb, (C,), jnp.float32, -bound, bound)
    bn_gamma = jnp.ones((C,), jnp.float32)
    bn_beta = jnp.zeros((C,), jnp.float32)

    out = conv_layer_normal(x, conv_weight, conv_bias, bn_gamma, bn_beta)
    out = jax.block_until_ready(out)

    ref = reference(x, conv_weight, conv_bias, bn_gamma, bn_beta)
    assert out.shape == (B, L_OUT, C), out.shape
    assert jnp.allclose(out, ref, atol=5e-2, rtol=5e-2), float(jnp.max(jnp.abs(out - ref)))

    print("KERNEL_OK")
</pallas_src>

<mosaic_0001>
module attributes {stable_mosaic.version = 11 : i64} {
  func.func @conv_layer_kernel(%arg0: memref<2x16x32xf32, #tpu.memory_space<vmem>>, %arg1: memref<96x32xbf16, #tpu.memory_space<vmem>>, %arg2: memref<3x32xf32, #tpu.memory_space<vmem>>, %arg3: memref<2x8x32xf32, #tpu.memory_space<vmem>>, %arg4: memref<32x32xf32, #tpu.memory_space<vmem>>) attributes {dimension_semantics = [], scalar_prefetch = 0 : i64, scratch_operands = 1 : i64, tpu.core_type = #tpu.core_type<tc>} {
    %c0 = arith.constant 0 : index
    %c0_0 = arith.constant 0 : index
    %c0_1 = arith.constant 0 : index
    %0 = vector.load %arg0[%c0, %c0_0, %c0_1] : memref<2x16x32xf32, #tpu.memory_space<vmem>>, vector<2x16x32xf32>
    %1 = arith.truncf %0 : vector<2x16x32xf32> to vector<2x16x32xbf16>
    %2 = vector.extract_strided_slice %1 {offsets = [0, 15, 0], sizes = [2, 1, 32], strides = [1, 1, 1]} : vector<2x16x32xbf16> to vector<2x1x32xbf16>
    %3 = vector.extract_strided_slice %1 {offsets = [0, 0, 0], sizes = [2, 15, 32], strides = [1, 1, 1]} : vector<2x16x32xbf16> to vector<2x15x32xbf16>
    %4 = tpu.concatenate %2, %3 in 1 : vector<2x1x32xbf16>, vector<2x15x32xbf16> -> vector<2x16x32xbf16>
    %5 = vector.extract_strided_slice %1 {offsets = [0, 1, 0], sizes = [2, 15, 32], strides = [1, 1, 1]} : vector<2x16x32xbf16> to vector<2x15x32xbf16>
    %6 = vector.extract_strided_slice %1 {offsets = [0, 0, 0], sizes = [2, 1, 32], strides = [1, 1, 1]} : vector<2x16x32xbf16> to vector<2x1x32xbf16>
    %7 = tpu.concatenate %5, %6 in 1 : vector<2x15x32xbf16>, vector<2x1x32xbf16> -> vector<2x16x32xbf16>
    %8 = tpu.concatenate %4, %1, %7 in 2 : vector<2x16x32xbf16>, vector<2x16x32xbf16>, vector<2x16x32xbf16> -> vector<2x16x96xbf16>
    %9 = vector.shape_cast %8 : vector<2x16x96xbf16> to vector<32x96xbf16>
    %c0_2 = arith.constant 0 : index
    %c0_3 = arith.constant 0 : index
    %10 = vector.load %arg1[%c0_2, %c0_3] : memref<96x32xbf16, #tpu.memory_space<vmem>>, vector<96x32xbf16>
    %cst = arith.constant dense<0.000000e+00> : vector<32x32xf32>
    %11 = tpu.matmul %9, %10, %cst {dimension_numbers = #tpu.dot_dimension_numbers<[1], [0], [0], [1], [0, 0, 1, 1], [], []>} : vector<32x96xbf16>, vector<96x32xbf16>, vector<32x32xf32> -> vector<32x32xf32>
    %c0_4 = arith.constant 0 : index
    %c0_5 = arith.constant 0 : index
    %12 = vector.load %arg2[%c0_4, %c0_5] : memref<3x32xf32, #tpu.memory_space<vmem>>, vector<3x32xf32>
    %13 = vector.extract_strided_slice %12 {offsets = [0, 0], sizes = [1, 32], strides = [1, 1]} : vector<3x32xf32> to vector<1x32xf32>
    %14 = vector.extract_strided_slice %12 {offsets = [1, 0], sizes = [1, 32], strides = [1, 1]} : vector<3x32xf32> to vector<1x32xf32>
    %15 = vector.extract_strided_slice %12 {offsets = [2, 0], sizes = [1, 32], strides = [1, 1]} : vector<3x32xf32> to vector<1x32xf32>
    %16 = vector.broadcast %13 : vector<1x32xf32> to vector<32x32xf32>
    %17 = arith.addf %11, %16 : vector<32x32xf32>
    %cst_6 = arith.constant dense<0.000000e+00> : vector<32xf32>
    %18 = vector.multi_reduction <add>, %17, %cst_6 [0] : vector<32x32xf32> to vector<32xf32>
    %19 = vector.shape_cast %18 : vector<32xf32> to vector<1x32xf32>
    %cst_7 = arith.constant 3.200000e+01 : f32
    %20 = vector.broadcast %cst_7 : f32 to vector<1x32xf32>
    %21 = arith.divf %19, %20 : vector<1x32xf32>
    %22 = vector.broadcast %21 : vector<1x32xf32> to vector<32x32xf32>
    %23 = arith.subf %17, %22 : vector<32x32xf32>
    %24 = arith.mulf %23, %23 : vector<32x32xf32>
    %cst_8 = arith.constant dense<0.000000e+00> : vector<32xf32>
    %25 = vector.multi_reduction <add>, %24, %cst_8 [0] : vector<32x32xf32> to vector<32xf32>
    %26 = vector.shape_cast %25 : vector<32xf32> to vector<1x32xf32>
    %cst_9 = arith.constant 3.200000e+01 : f32
    %27 = vector.broadcast %cst_9 : f32 to vector<1x32xf32>
    %28 = arith.divf %26, %27 : vector<1x32xf32>
    %cst_10 = arith.constant 9.99999974E-6 : f32
    %29 = vector.broadcast %cst_10 : f32 to vector<1x32xf32>
    %30 = arith.addf %28, %29 : vector<1x32xf32>
    %31 = math.rsqrt %30 : vector<1x32xf32>
    %32 = arith.mulf %14, %31 : vector<1x32xf32>
    %33 = arith.mulf %21, %32 : vector<1x32xf32>
    %34 = arith.subf %15, %33 : vector<1x32xf32>
    %35 = vector.broadcast %32 : vector<1x32xf32> to vector<32x32xf32>
    %36 = arith.mulf %17, %35 : vector<32x32xf32>
    %37 = vector.broadcast %34 : vector<1x32xf32> to vector<32x32xf32>
    %38 = arith.addf %36, %37 : vector<32x32xf32>
    %cst_11 = arith.constant 0.000000e+00 : f32
    %39 = vector.broadcast %cst_11 : f32 to vector<32x32xf32>
    %40 = arith.maximumf %38, %39 : vector<32x32xf32>
    %c0_12 = arith.constant 0 : index
    %c0_13 = arith.constant 0 : index
    %41 = vector.load %arg4[%c0_12, %c0_13] : memref<32x32xf32, #tpu.memory_space<vmem>>, vector<32x32xf32>
    tpu.vector_store %arg4[%c0_12, %c0_13], %40 {strides = array<i32>} : memref<32x32xf32, #tpu.memory_space<vmem>>, vector<32x32xf32>,
    %c0_14 = arith.constant 0 : index
    %c0_15 = arith.constant 0 : index
    %42 = tpu.strided_load %arg4[%c0_14, %c0_15] {strides = array<i32: 2, 1>} : memref<32x32xf32, #tpu.memory_space<vmem>>, vector<16x32xf32>
    %43 = vector.shape_cast %42 : vector<16x32xf32> to vector<2x8x32xf32>
    %c1 = arith.constant 1 : index
    %c0_16 = arith.constant 0 : index
    %44 = tpu.strided_load %arg4[%c1, %c0_16] {strides = array<i32: 2, 1>} : memref<32x32xf32, #tpu.memory_space<vmem>>, vector<16x32xf32>
    %45 = vector.shape_cast %44 : vector<16x32xf32> to vector<2x8x32xf32>
    %46 = vector.extract_strided_slice %43 {offsets = [0, 0, 0], sizes = [2, 1, 32], strides = [1, 1, 1]} : vector<2x8x32xf32> to vector<2x1x32xf32>
    %47 = vector.extract_strided_slice %45 {offsets = [0, 0, 0], sizes = [2, 7, 32], strides = [1, 1, 1]} : vector<2x8x32xf32> to vector<2x7x32xf32>
    %48 = tpu.concatenate %46, %47 in 1 : vector<2x1x32xf32>, vector<2x7x32xf32> -> vector<2x8x32xf32>
    %49 = arith.maximumf %43, %45 : vector<2x8x32xf32>
    %50 = arith.maximumf %49, %48 : vector<2x8x32xf32>
    %c0_17 = arith.constant 0 : index
    %c0_18 = arith.constant 0 : index
    %c0_19 = arith.constant 0 : index
    %51 = vector.load %arg3[%c0_17, %c0_18, %c0_19] : memref<2x8x32xf32, #tpu.memory_space<vmem>>, vector<2x8x32xf32>
    tpu.vector_store %arg3[%c0_17, %c0_18, %c0_19], %50 {strides = array<i32>} : memref<2x8x32xf32, #tpu.memory_space<vmem>>, vector<2x8x32xf32>,
    return
  }
}

</mosaic_0001>

<llo_original>
// kernel: tpu_custom_call.1
$region0: #{tpu_custom_call.1}
  #allocation0 [shape = 'u32[]', space=smem, size = 0x4, offset = 0x4, fixed_abs, tag = 'smem constant byte address 0x4 - core index']
  #allocation1 [shape = 'u32[144,128]{1,0:T(1,128)}', space=vmem, size = 0x12000, scoped, tag = 'internal scratch']
  #allocation2 [shape = 'f32[32,32]{1,0:T(8,128)}', space=vmem, size = 0x4000, scoped, tag = 'scratch operand']
  %s0 = inlined_call_operand.vmem [shape: f32[2,16,32], index: 0, kind: input, shape index: {}]
  %s1 = inlined_call_operand.vmem [shape: bf16[96,32], index: 1, kind: input, shape index: {}]
  %s2 = inlined_call_operand.vmem [shape: f32[3,32], index: 2, kind: input, shape index: {}]
  %s3 = inlined_call_operand.hbm [shape: f32[2,8,32], index: 3, kind: output, shape index: {}]
  %s4 = sld [smem:[#allocation0]]
  $region22: #{tpu_custom_call.1} parent=0
    _
  %s6 = ssub.s32 1, %s4
  %s7 = scalar_select 0, %s6, %s4
  $region1: #{tpu_custom_call.1} parent=0
    #allocation3 [shape = 'u8[8192]{0}', space=vmem, size = 0x2000, scoped, tag = 'output window, operand 0, single buffered']
    #allocation4 [shape = 's32[1]{0}', space=sflag, size = 0x4, scoped, tag = 'scoped memory for tpu_custom_call.1']
    %8 = vsyncpa [#allocation4], 0
    // Predicated region
    $region2: #{tpu_custom_call.1} parent=1 // pred_check
      _
    $region3: #{tpu_custom_call.1} parent=1 // pred_check_branch
      %10 = sbr.rel (0) target = $region5
    $region4: #{tpu_custom_call.1} parent=1 // pred_region
      _
    $region5: #{tpu_custom_call.1} parent=1 // pred_fallthru
      _
    // Predicated region
    $region6: #{tpu_custom_call.1} parent=1 // pred_check
      _
    $region7: #{tpu_custom_call.1} parent=1 // pred_check_branch
      %12 = sbr.rel (0) target = $region9
    $region8: #{tpu_custom_call.1} parent=1 // pred_region
      _
    $region9: #{tpu_custom_call.1} parent=1 // pred_fallthru
      _
    // Predicated region
    $region10: #{tpu_custom_call.1} parent=1 // pred_check
      _
    $region11: #{tpu_custom_call.1} parent=1 // pred_check_branch
      %14 = sbr.rel (0) target = $region13
    $region12: #{tpu_custom_call.1} parent=1 // pred_region
      _
    $region13: #{tpu_custom_call.1} parent=1 // pred_fallthru
      _
    %v16 = vld [vmem:[%s0] sm:$0xff]
    %v17 = vld [vmem:[%s0 + $0x8] sm:$0xff]
    %v18 = vld [vmem:[%s0 + $0x10] sm:$0xff]
    %v19 = vld [vmem:[%s0 + $0x18] sm:$0xff]
    %v20 = vpack.c.bf16 %v17, %v16
    %v21 = vpack.c.bf16 %v19, %v18
    %v23 = vshrl.u32 %v20, 16
    %v25 = vrot.slane %v23, 7
    %v27 = vshrl.u32 %v21, 16
    %v29 = vrot.slane %v27, 7
    %v32 = vshll.u32 %v20, 16
    %v34 = vor.u32 %v25, %v32
    %v35 = vshll.u32 %v21, 16
    %v37 = vor.u32 %v29, %v35
    %vm40 = vcmask 1040384
    %vm41 = vsmask.f32 256
    %vm42 = vmand %vm40, %vm41
    %v43 = vsel %vm42, %v25, %v34
    %v44 = vsel %vm42, %v29, %v37
    %v45 = vrot.slane %v32, 1
    %v46 = vor.u32 %v23, %v45
    %v47 = vrot.slane %v35, 1
    %v48 = vor.u32 %v27, %v47
    %vm53 = vcmask 1047552
    %vm54 = vsmask.f32 7424
    %vm55 = vmand %vm53, %vm54
    %v56 = vsel %vm55, %v46, %v45
    %v57 = vsel %vm55, %v48, %v47
    %60 = vrot.lane.b32.xlu0 %v20, 32
    %v61 = vpop.permute.xlu0 %60
    %62 = vrot.lane.b32.xlu0 %v21, 32
    %v63 = vpop.permute.xlu0 %62
    %66 = vrot.lane.b32.xlu0 %v56, 64
    %v67 = vpop.permute.xlu0 %66
    %68 = vrot.lane.b32.xlu0 %v57, 64
    %v69 = vpop.permute.xlu0 %68
    %vm70 = vcmask 261120
    %v73 = vsel %vm70, %v43, %v61
    %v76 = vsel %vm70, %v44, %v63
    %vm77 = vcmask 523264
    %v79 = vsel %vm77, %v73, %v67
    %v81 = vsel %vm77, %v76, %v69
    %v82 = vld [vmem:[%s1] sm:$0xf]
    %v83 = vld [vmem:[%s1 + $0x4] sm:$0xf]
    %v84 = vld [vmem:[%s1 + $0x8] sm:$0xf]
    %v85 = vld [vmem:[%s1 + $0xc] sm:$0xf]
    %v86 = vld [vmem:[%s1 + $0x10] sm:$0xf]
    %v87 = vld [vmem:[%s1 + $0x14] sm:$0xf]
    %v88 = vld [vmem:[%s1 + $0x18] sm:$0xf]
    %v89 = vld [vmem:[%s1 + $0x1c] sm:$0xf]
    %v90 = vld [vmem:[%s1 + $0x20] sm:$0xf]
    %v91 = vld [vmem:[%s1 + $0x24] sm:$0xf]
    %v92 = vld [vmem:[%s1 + $0x28] sm:$0xf]
    %v93 = vld [vmem:[%s1 + $0x2c] sm:$0xf]
    %v94 = vld [vmem:[%s2] sm:$0x7]
    %v95 = vlaneseq
    %v96 = vshrl.u32 %v95, 7
    %v97 = vsub.s32 0, %v96
    %v98 = vrot.slane %v94, %v97
    %v111 = vunpack.c.l.b16 %v82
    %v112 = vunpack.c.l.b16 %v83
    %v113 = vunpack.c.l.b16 %v84
    %v114 = vunpack.c.l.b16 %v85
    %v115 = vunpack.c.l.b16 %v86
    %v116 = vunpack.c.l.b16 %v87
    %v117 = vunpack.c.l.b16 %v88
    %v118 = vunpack.c.l.b16 %v89
    %v119 = vunpack.c.l.b16 %v90
    %v120 = vunpack.c.l.b16 %v91
    %v121 = vunpack.c.l.b16 %v92
    %v122 = vunpack.c.l.b16 %v93
    %v123 = vpack.c.b16 %v112, %v111
    %v124 = vpack.c.b16 %v114, %v113
    %v125 = vpack.c.b16 %v116, %v115
    %v126 = vpack.c.b16 %v118, %v117
    %v127 = vpack.c.b16 %v120, %v119
    %v128 = vpack.c.b16 %v122, %v121
    %vm135 = vcmask 785408
    %v136 = vsel %vm135, %v79, 0
    %v138 = vsel %vm135, %v81, 0
    %140 = vmatprep.subr.bf16.mxu0 0
    %141 = vmatpush1.bf16.msra.mxu0 0
    %142 = vmatprep.subr.bf16.mxu0 0
    %143 = vmatpush1.bf16.msra.mxu0 0
    %144 = vmatprep.subr.bf16.mxu0 0
    %145 = vmatpush1.bf16.msra.mxu0 %v128
    %146 = vmatprep.subr.bf16.mxu0 0
    %147 = vmatpush1.bf16.msra.mxu0 %v127
    %148 = vmatprep.subr.bf16.mxu0 0
    %149 = vmatpush1.bf16.msra.mxu0 %v126
    %150 = vmatprep.subr.bf16.mxu0 0
    %151 = vmatpush1.bf16.msra.mxu0 %v125
    %152 = vmatprep.subr.bf16.mxu0 0
    %153 = vmatpush1.bf16.msra.mxu0 %v124
    %154 = vmatprep.subr.bf16.mxu0 0
    %155 = vmatpush1.bf16.msra.mxu0 %v123
    %156 = vmatprep.subr.bf16.mxu0 0
    %157 = vmatpush2.bf16.msra.mxu0 0
    %158 = vmatprep.subr.bf16.mxu0 0
    %159 = vmatpush2.bf16.msra.mxu0 0
    %160 = vmatprep.subr.bf16.mxu0 0
    %161 = vmatpush2.bf16.msra.mxu0 0
    %162 = vmatprep.subr.bf16.mxu0 0
    %163 = vmatpush2.bf16.msra.mxu0 0
    %164 = vmatprep.subr.bf16.mxu0 0
    %165 = vmatpush2.bf16.msra.mxu0 0
    %166 = vmatprep.subr.bf16.mxu0 0
    %167 = vmatpush2.bf16.msra.mxu0 0
    %168 = vmatprep.subr.bf16.mxu0 0
    %169 = vmatpush2.bf16.msra.mxu0 0
    %170 = vmatprep.subr.bf16.mxu0 0
    %171 = vmatpush2.bf16.msra.mxu0 0
    %172 = vmatprep.mubr.bf16.mxu0 0
    %173 = vmatmul.mubr.bf16.gmra.mxu0 %v136
    %v174 = vpop.f32.mrf.mxu0
    %v175 = vadd.f32 %v98, %v174
    %v176 = vpop.f32.mrf.mxu0
    %v177 = vpop.f32.mrf.mxu0
    %v178 = vadd.f32 %v98, %v177
    %v179 = vpop.f32.mrf.mxu0
    %180 = vmatprep.mubr.bf16.mxu0 0
    %181 = vmatmul.mubr.bf16.gmra.mxu0 %v138
    %v182 = vpop.f32.mrf.mxu0
    %v183 = vadd.f32 %v98, %v182
    %v184 = vpop.f32.mrf.mxu0
    %v185 = vpop.f32.mrf.mxu0
    %v186 = vadd.f32 %v98, %v185
    %v187 = vpop.f32.mrf.mxu0
    %188 = vdwg.mxu0
    %v189 = vsel %vm70, %v175, 0.0
    %v190 = vsel %vm70, %v178, 0.0
    %v191 = vadd.f32 %v189, %v190
    %v192 = vsel %vm70, %v183, 0.0
    %v193 = vadd.f32 %v191, %v192
    %v194 = vsel %vm70, %v186, 0.0
    %v195 = vadd.f32 %v193, %v194
    %v196 = vrot.slane %v195, 4
    %v197 = vadd.f32 %v195, %v196
    %v198 = vrot.slane %v197, 2
    %v199 = vadd.f32 %v197, %v198
    %v200 = vrot.slane %v199, 1
    %v201 = vadd.f32 %v199, %v200
    %v202 = vrcp.pop 32.0
    %v203 = vmul.f32 %v201, %v202
    %v204 = vsub.f32 %v175, %v203
    %v205 = vsub.f32 %v178, %v203
    %v206 = vsub.f32 %v183, %v203
    %v207 = vsub.f32 %v186, %v203
    %v208 = vmul.f32 %v204, %v204
    %v209 = vmul.f32 %v205, %v205
    %v210 = vmul.f32 %v206, %v206
    %v211 = vmul.f32 %v207, %v207
    %v212 = vsel %vm70, %v208, 0.0
    %v213 = vsel %vm70, %v209, 0.0
    %v214 = vadd.f32 %v212, %v213
    %v215 = vsel %vm70, %v210, 0.0
    %v216 = vadd.f32 %v214, %v215
    %v217 = vsel %vm70, %v211, 0.0
    %v218 = vadd.f32 %v216, %v217
    %v219 = vrot.slane %v218, 4
    %v220 = vadd.f32 %v218, %v219
    %v221 = vrot.slane %v220, 2
    %v222 = vadd.f32 %v220, %v221
    %v223 = vrot.slane %v222, 1
    %v224 = vadd.f32 %v222, %v223
    %v225 = vmul.f32 %v224, %v202
    %v226 = vadd.f32 %v225, 1e-05
    %v227 = vrsqrt.pop %v226
    %v228 = vmul.f32 %v94, %v227
    %v229 = vmul.f32 %v203, %v228
    %v231 = vrot.slane %v229, 7
    %v233 = vsub.f32 %v94, %v231
    %v234 = vlaneseq
    %v235 = vshrl.u32 %v234, 7
    %v236 = vsub.s32 1, %v235
    %v237 = vrot.slane %v228, %v236
    %v238 = vmul.f32 %v175, %v237
    %v239 = vmul.f32 %v178, %v237
    %v240 = vmul.f32 %v183, %v237
    %v241 = vmul.f32 %v186, %v237
    %v242 = vlaneseq
    %v243 = vshrl.u32 %v242, 7
    %v244 = vsub.s32 2, %v243
    %v245 = vrot.slane %v233, %v244
    %v246 = vadd.f32 %v238, %v245
    %v247 = vadd.f32 %v239, %v245
    %v248 = vadd.f32 %v240, %v245
    %v249 = vadd.f32 %v241, %v245
    %v250 = vmax.f32 %v246, 0.0
    %v251 = vmax.f32 %v247, 0.0
    %v252 = vmax.f32 %v248, 0.0
    %v253 = vmax.f32 %v249, 0.0
    %254 = vst.msk [vmem:[#allocation2] sm:$0xff] %vm70, %v250
    %255 = vst.msk [vmem:[#allocation2 + $0x8] sm:$0xff] %vm70, %v251
    %256 = vst.msk [vmem:[#allocation2 + $0x10] sm:$0xff] %vm70, %v252
    %257 = vst.msk [vmem:[#allocation2 + $0x18] sm:$0xff] %vm70, %v253
    %v258 = vld [vmem:[#allocation2] ss:$2 sm:$0xff]
    %s259 = scalar_lea.vmem [#allocation2], 16
    %v260 = vld [vmem:[%s259] ss:$2 sm:$0xff]
    %s261 = scalar_lea.vmem [#allocation2], 1
    %v262 = vld [vmem:[%s261] ss:$2 sm:$0xff]
    %s263 = scalar_lea.vmem [#allocation2], 17
    %v264 = vld [vmem:[%s263] ss:$2 sm:$0xff]
    %v267 = vrot.slane %v262, 7
    %v268 = vrot.slane %v264, 7
    %vm271 = vcmask 1040384
    %v272 = vsel %vm271, %v258, %v267
    %v273 = vsel %vm271, %v260, %v268
    %v274 = vmax.f32 %v258, %v262
    %v275 = vmax.f32 %v260, %v264
    %v276 = vmax.f32 %v274, %v272
    %v277 = vmax.f32 %v275, %v273
    %278 = vst.msk [vmem:[#allocation3] sm:$0xff] %vm70, %v276
    %279 = vst.msk [vmem:[#allocation3 + $0x8] sm:$0xff] %vm70, %v277
    // Predicated region
    $region14: #{tpu_custom_call.1} parent=1 // pred_check
      _
    $region15: #{tpu_custom_call.1} parent=1 // pred_check_branch
      %281 = sbr.rel (0) target = $region17
    $region16: #{tpu_custom_call.1} parent=1 // pred_region
      %s283 = ssub.s32 256, 256
      %284 = vsyncadd [#allocation4], %s283
      %s285 = sshll.u32 [#allocation3], 4
      %s286 = int_to_ptr.vmem [resolvable:$true] %s285
      %291 = dma.vmem_to_hbm [thread:$0]  %s286, 256, %s3, [#allocation4], 128, 128, 8
    $region17: #{tpu_custom_call.1} parent=1 // pred_fallthru
      _
    // Predicated region
    $region18: #{tpu_custom_call.1} parent=1 // pred_check
      _
    $region19: #{tpu_custom_call.1} parent=1 // pred_check_branch
      %293 = sbr.rel (0) target = $region21
    $region20: #{tpu_custom_call.1} parent=1 // pred_region
      %294 = dma.done [#allocation4], 256
    $region21: #{tpu_custom_call.1} parent=1 // pred_fallthru
      _
    %295 = vsyncpa [#allocation4], 1

</llo_original>
